<compile_context>
chip_gen: v5e
topology: v5e:2x2
jax: 0.10.0
libtpu: 0.0.40
codegen_flags: <defaults>
</compile_context>

<pallas_src>
import functools

import jax
import jax.numpy as jnp
from jax.experimental import pallas as pl
from jax.experimental.pallas import tpu as pltpu


# ---------------------------------------------------------------------------
# Pallas kernel: fused MLP
#   h = relu(x @ W1s + b1a[action])           (b1a = W1_act + b1, f32 table)
#   y = h @ W2 + b2
# ---------------------------------------------------------------------------
def _fd_mlp_kernel(x_ref, act_ref, w1s_ref, b1a_ref, w2_ref, b2_ref, o_ref):
    x = x_ref[...]                               # (TM, 128) bf16
    act = act_ref[...]                           # (TM, 1)   int32

    # Layer 1: single K=128 MXU pass, f32 accumulate.
    h = jnp.dot(x, w1s_ref[...], preferred_element_type=jnp.float32)  # (TM,256)

    # Action-conditioned bias via masked VPU selects (no K=A MXU pass).
    num_actions = b1a_ref.shape[0]
    bias = jnp.where(act == 0, b1a_ref[pl.ds(0, 1), :], 0.0)          # (TM,256)
    for a in range(1, num_actions):
        bias = jnp.where(act == a, b1a_ref[pl.ds(a, 1), :], bias)
    h = jnp.maximum(h + bias, 0.0)               # ReLU, f32

    # Layer 2.
    y = jnp.dot(h.astype(jnp.bfloat16), w2_ref[...],
                preferred_element_type=jnp.float32)
    o_ref[...] = (y + b2_ref[...]).astype(o_ref.dtype)


# ---------------------------------------------------------------------------
# Tiling policy
# ---------------------------------------------------------------------------
_TM_CAP = 2048      # rows per tile (x+act+y double buffers ~5.6 MB at cap)
_MIN_TILES = 2      # keep >= 2 tiles so both v7x TensorCores get work


def _round_up(x, m):
    return ((x + m - 1) // m) * m


def _tiling(m):
    """Return (tm, n_tiles, m_pad) with tm % 8 == 0 and bounded pad waste."""
    m8 = _round_up(max(m, 8), 8)
    max_tiles = m8 // 8                                  # smallest legal tile
    n_tiles = max(pl.cdiv(m8, _TM_CAP), min(_MIN_TILES, max_tiles))
    tm = _round_up(pl.cdiv(m8, n_tiles), 8)
    return tm, n_tiles, tm * n_tiles


def _fd_mlp(x, act, w1s, b1a, w2, b2, *, tm):
    """x: (M_pad, 128) bf16, act: (M_pad, 1) i32 -> (M_pad, 128) f32."""
    m_pad, d_in = x.shape
    hidden = w1s.shape[1]
    d_out = w2.shape[1]
    grid = (m_pad // tm,)

    flops = 2 * m_pad * (d_in * hidden + hidden * d_out)
    bytes_accessed = (
        x.size * 2                                  # bf16 activations in
        + act.size * 4                              # int32 action ids
        + m_pad * d_out * 4                         # f32 output
        + (w1s.size + w2.size) * 2                  # bf16 weights
        + (b1a.size + b2.size) * 4                  # f32 bias tables
    )

    return pl.pallas_call(
        _fd_mlp_kernel,
        out_shape=jax.ShapeDtypeStruct((m_pad, d_out), jnp.float32),
        grid_spec=pltpu.PrefetchScalarGridSpec(
            num_scalar_prefetch=0,
            grid=grid,
            in_specs=[
                pl.BlockSpec((tm, d_in), lambda i: (i, 0)),     # x rows (bf16)
                pl.BlockSpec((tm, 1), lambda i: (i, 0)),        # action ids
                pl.BlockSpec(w1s.shape, lambda i: (0, 0)),      # VMEM-resident
                pl.BlockSpec(b1a.shape, lambda i: (0, 0)),
                pl.BlockSpec(w2.shape, lambda i: (0, 0)),
                pl.BlockSpec(b2.shape, lambda i: (0, 0)),
            ],
            out_specs=pl.BlockSpec((tm, d_out), lambda i: (i, 0)),
        ),
        compiler_params=pltpu.CompilerParams(
            dimension_semantics=("parallel",),
            vmem_limit_bytes=32 * 1024 * 1024,
        ),
        cost_estimate=pl.CostEstimate(
            flops=flops, transcendentals=0, bytes_accessed=bytes_accessed),
    )(x, act, w1s, b1a, w2, b2)


# ---------------------------------------------------------------------------
# Parameter init (torch.nn.init.orthogonal_ on the (out,in) weight, zero bias)
# Weights stored as: W1_state (128,256) bf16, b1a = W1_act + b1 (A,256) f32,
# W2 (256,128) bf16, b2 (1,128) f32.
# ---------------------------------------------------------------------------
def _orthogonal(key, shape, gain):
    rows, cols = shape                      # torch layout: (out, in)
    a = jax.random.normal(key, (rows, cols), dtype=jnp.float32)
    transpose = rows < cols
    if transpose:
        a = a.T
    q, r = jnp.linalg.qr(a)
    q = q * jnp.sign(jnp.diag(r))           # sign correction, as in torch
    if transpose:
        q = q.T
    return gain * q


def make_params(key, num_actions, input_size=128, hidden=256, out_size=128):
    k1, k2 = jax.random.split(key)
    relu_gain = 2.0 ** 0.5                  # nn.init.calculate_gain('relu')
    # torch weight (out, in); transpose so y = x @ W
    w1 = _orthogonal(k1, (hidden, input_size + num_actions), relu_gain).T
    w2 = _orthogonal(k2, (out_size, hidden), 1.0).T
    b1 = jnp.zeros((hidden,), dtype=jnp.float32)
    b2 = jnp.zeros((1, out_size), dtype=jnp.float32)

    w1s = w1[:input_size].astype(jnp.bfloat16)                  # (128, 256)
    b1a = (w1[input_size:] + b1[None, :]).astype(jnp.float32)   # (A, 256) f32
    return w1s, b1a, w2.astype(jnp.bfloat16), b2


# ---------------------------------------------------------------------------
# Forward pass (ForwardDynamicsNet.forward)
# ---------------------------------------------------------------------------
@jax.jit
def forward_dynamics_net(state_embedding, action, params):
    """state_embedding: (T, B, 128) f32, action: (T, B) int -> (T, B, 128) f32."""
    w1s, b1a, w2, b2 = params
    T, B, D = state_embedding.shape
    M = T * B

    x = state_embedding.reshape(M, D).astype(jnp.bfloat16)
    act = action.reshape(M, 1).astype(jnp.int32)

    tm, _, m_pad = _tiling(M)
    if m_pad != M:
        # Padded rows get x=0 / action=0 -> garbage rows, sliced off below.
        x = jnp.pad(x, ((0, m_pad - M), (0, 0)))
        act = jnp.pad(act, ((0, m_pad - M), (0, 0)))

    y = _fd_mlp(x, act, w1s, b1a, w2, b2, tm=tm)
    return y[:M].reshape(T, B, w2.shape[1])


# ---------------------------------------------------------------------------
# Reference (plain JAX) with the same bf16-operand / f32-accumulate math.
# (vs. a pure-f32 torch forward the expected deviation is ~1e-2 due to bf16
# weight/activation rounding.)
# ---------------------------------------------------------------------------
def _reference(state_embedding, action, params):
    w1s, b1a, w2, b2 = params
    T, B, D = state_embedding.shape
    x = state_embedding.reshape(T * B, D).astype(jnp.bfloat16)
    h = jnp.dot(x, w1s, preferred_element_type=jnp.float32)
    h = h + b1a[action.reshape(-1)]
    h = jnp.maximum(h, 0.0)
    y = jnp.dot(h.astype(jnp.bfloat16), w2,
                preferred_element_type=jnp.float32) + b2
    return y.reshape(T, B, -1)


if __name__ == "__main__":
    num_actions = 6
    key = jax.random.PRNGKey(0)
    k_params, k_emb, k_act = jax.random.split(key, 3)
    params = make_params(k_params, num_actions)

    # Case 1: small, evenly tiled (T=8, B=2 -> M=16 -> 2 tiles of 8 rows).
    T, B, D = 8, 2, 128
    state_embedding = jax.random.normal(k_emb, (T, B, D), dtype=jnp.float32)
    action = jax.random.randint(k_act, (T, B), 0, num_actions, dtype=jnp.int32)

    out = forward_dynamics_net(state_embedding, action, params)
    out = jax.block_until_ready(out)
    ref = _reference(state_embedding, action, params)
    assert out.shape == (T, B, 128), out.shape
    assert jnp.allclose(out, ref, atol=1e-2, rtol=1e-2), "mismatch vs reference"

    # Case 2: uneven M to exercise the bounded-padding path (M=39 -> tm=24).
    T2, B2 = 13, 3
    k_emb2, k_act2 = jax.random.split(jax.random.PRNGKey(1))
    se2 = jax.random.normal(k_emb2, (T2, B2, D), dtype=jnp.float32)
    ac2 = jax.random.randint(k_act2, (T2, B2), 0, num_actions, dtype=jnp.int32)
    out2 = jax.block_until_ready(forward_dynamics_net(se2, ac2, params))
    ref2 = _reference(se2, ac2, params)
    assert out2.shape == (T2, B2, 128), out2.shape
    assert jnp.allclose(out2, ref2, atol=1e-2, rtol=1e-2), "mismatch (padded case)"

    print("KERNEL_OK")
</pallas_src>

<mosaic_0001>
module attributes {stable_mosaic.version = 11 : i64} {
  func.func @_fd_mlp_kernel(%arg0: i32, %arg1: memref<8x128xbf16, #tpu.memory_space<vmem>>, %arg2: memref<8x1xi32, #tpu.memory_space<vmem>>, %arg3: memref<128x256xbf16, #tpu.memory_space<vmem>>, %arg4: memref<6x256xf32, #tpu.memory_space<vmem>>, %arg5: memref<256x128xbf16, #tpu.memory_space<vmem>>, %arg6: memref<1x128xf32, #tpu.memory_space<vmem>>, %arg7: memref<8x128xf32, #tpu.memory_space<vmem>>) attributes {dimension_semantics = [#tpu.dimension_semantics<parallel>], iteration_bounds = array<i64: 2>, scalar_prefetch = 0 : i64, scratch_operands = 0 : i64, tpu.core_type = #tpu.core_type<tc>, window_params = [{transform_indices = @transform_0, window_bounds = array<i64: 8, 128>}, {transform_indices = @transform_1, window_bounds = array<i64: 8, 1>}, {pipeline_mode = #tpu.pipeline_mode<synchronous>, transform_indices = @transform_2, window_bounds = array<i64: 128, 256>}, {pipeline_mode = #tpu.pipeline_mode<synchronous>, transform_indices = @transform_3, window_bounds = array<i64: 6, 256>}, {pipeline_mode = #tpu.pipeline_mode<synchronous>, transform_indices = @transform_4, window_bounds = array<i64: 256, 128>}, {pipeline_mode = #tpu.pipeline_mode<synchronous>, transform_indices = @transform_5, window_bounds = array<i64: 1, 128>}, {transform_indices = @transform_6, window_bounds = array<i64: 8, 128>}]} {
    %c0 = arith.constant 0 : index
    %c0_0 = arith.constant 0 : index
    %0 = vector.load %arg1[%c0, %c0_0] : memref<8x128xbf16, #tpu.memory_space<vmem>>, vector<8x128xbf16>
    %c0_1 = arith.constant 0 : index
    %c0_2 = arith.constant 0 : index
    %1 = vector.load %arg2[%c0_1, %c0_2] : memref<8x1xi32, #tpu.memory_space<vmem>>, vector<8x1xi32>
    %c0_3 = arith.constant 0 : index
    %c0_4 = arith.constant 0 : index
    %2 = vector.load %arg3[%c0_3, %c0_4] : memref<128x256xbf16, #tpu.memory_space<vmem>>, vector<128x256xbf16>
    %cst = arith.constant dense<0.000000e+00> : vector<8x256xf32>
    %3 = tpu.matmul %0, %2, %cst {dimension_numbers = #tpu.dot_dimension_numbers<[1], [0], [0], [1], [0, 0, 1, 1], [], []>} : vector<8x128xbf16>, vector<128x256xbf16>, vector<8x256xf32> -> vector<8x256xf32>
    %c0_i32 = arith.constant 0 : i32
    %4 = vector.broadcast %c0_i32 : i32 to vector<8x1xi32>
    %5 = arith.cmpi eq, %1, %4 : vector<8x1xi32>
    %c0_5 = arith.constant 0 : index
    %c0_6 = arith.constant 0 : index
    %6 = vector.load %arg4[%c0_5, %c0_6] : memref<6x256xf32, #tpu.memory_space<vmem>>, vector<1x256xf32>
    %cst_7 = arith.constant 0.000000e+00 : f32
    %7 = vector.shape_cast %5 : vector<8x1xi1> to vector<8x1xi1>
    %8 = vector.broadcast %7 : vector<8x1xi1> to vector<8x256xi1>
    %9 = vector.shape_cast %6 : vector<1x256xf32> to vector<1x256xf32>
    %10 = vector.broadcast %9 : vector<1x256xf32> to vector<8x256xf32>
    %11 = vector.broadcast %cst_7 : f32 to vector<8x256xf32>
    %12 = arith.select %8, %10, %11 : vector<8x256xi1>, vector<8x256xf32>
    %c1_i32 = arith.constant 1 : i32
    %13 = vector.broadcast %c1_i32 : i32 to vector<8x1xi32>
    %14 = arith.cmpi eq, %1, %13 : vector<8x1xi32>
    %c1 = arith.constant 1 : index
    %c0_8 = arith.constant 0 : index
    %15 = vector.load %arg4[%c1, %c0_8] : memref<6x256xf32, #tpu.memory_space<vmem>>, vector<1x256xf32>
    %16 = vector.shape_cast %14 : vector<8x1xi1> to vector<8x1xi1>
    %17 = vector.broadcast %16 : vector<8x1xi1> to vector<8x256xi1>
    %18 = vector.shape_cast %15 : vector<1x256xf32> to vector<1x256xf32>
    %19 = vector.broadcast %18 : vector<1x256xf32> to vector<8x256xf32>
    %20 = arith.select %17, %19, %12 : vector<8x256xi1>, vector<8x256xf32>
    %c2_i32 = arith.constant 2 : i32
    %21 = vector.broadcast %c2_i32 : i32 to vector<8x1xi32>
    %22 = arith.cmpi eq, %1, %21 : vector<8x1xi32>
    %c2 = arith.constant 2 : index
    %c0_9 = arith.constant 0 : index
    %23 = vector.load %arg4[%c2, %c0_9] : memref<6x256xf32, #tpu.memory_space<vmem>>, vector<1x256xf32>
    %24 = vector.shape_cast %22 : vector<8x1xi1> to vector<8x1xi1>
    %25 = vector.broadcast %24 : vector<8x1xi1> to vector<8x256xi1>
    %26 = vector.shape_cast %23 : vector<1x256xf32> to vector<1x256xf32>
    %27 = vector.broadcast %26 : vector<1x256xf32> to vector<8x256xf32>
    %28 = arith.select %25, %27, %20 : vector<8x256xi1>, vector<8x256xf32>
    %c3_i32 = arith.constant 3 : i32
    %29 = vector.broadcast %c3_i32 : i32 to vector<8x1xi32>
    %30 = arith.cmpi eq, %1, %29 : vector<8x1xi32>
    %c3 = arith.constant 3 : index
    %c0_10 = arith.constant 0 : index
    %31 = vector.load %arg4[%c3, %c0_10] : memref<6x256xf32, #tpu.memory_space<vmem>>, vector<1x256xf32>
    %32 = vector.shape_cast %30 : vector<8x1xi1> to vector<8x1xi1>
    %33 = vector.broadcast %32 : vector<8x1xi1> to vector<8x256xi1>
    %34 = vector.shape_cast %31 : vector<1x256xf32> to vector<1x256xf32>
    %35 = vector.broadcast %34 : vector<1x256xf32> to vector<8x256xf32>
    %36 = arith.select %33, %35, %28 : vector<8x256xi1>, vector<8x256xf32>
    %c4_i32 = arith.constant 4 : i32
    %37 = vector.broadcast %c4_i32 : i32 to vector<8x1xi32>
    %38 = arith.cmpi eq, %1, %37 : vector<8x1xi32>
    %c4 = arith.constant 4 : index
    %c0_11 = arith.constant 0 : index
    %39 = vector.load %arg4[%c4, %c0_11] : memref<6x256xf32, #tpu.memory_space<vmem>>, vector<1x256xf32>
    %40 = vector.shape_cast %38 : vector<8x1xi1> to vector<8x1xi1>
    %41 = vector.broadcast %40 : vector<8x1xi1> to vector<8x256xi1>
    %42 = vector.shape_cast %39 : vector<1x256xf32> to vector<1x256xf32>
    %43 = vector.broadcast %42 : vector<1x256xf32> to vector<8x256xf32>
    %44 = arith.select %41, %43, %36 : vector<8x256xi1>, vector<8x256xf32>
    %c5_i32 = arith.constant 5 : i32
    %45 = vector.broadcast %c5_i32 : i32 to vector<8x1xi32>
    %46 = arith.cmpi eq, %1, %45 : vector<8x1xi32>
    %c5 = arith.constant 5 : index
    %c0_12 = arith.constant 0 : index
    %47 = vector.load %arg4[%c5, %c0_12] : memref<6x256xf32, #tpu.memory_space<vmem>>, vector<1x256xf32>
    %48 = vector.shape_cast %46 : vector<8x1xi1> to vector<8x1xi1>
    %49 = vector.broadcast %48 : vector<8x1xi1> to vector<8x256xi1>
    %50 = vector.shape_cast %47 : vector<1x256xf32> to vector<1x256xf32>
    %51 = vector.broadcast %50 : vector<1x256xf32> to vector<8x256xf32>
    %52 = arith.select %49, %51, %44 : vector<8x256xi1>, vector<8x256xf32>
    %53 = arith.addf %3, %52 : vector<8x256xf32>
    %cst_13 = arith.constant 0.000000e+00 : f32
    %54 = vector.broadcast %cst_13 : f32 to vector<8x256xf32>
    %55 = arith.maximumf %53, %54 : vector<8x256xf32>
    %56 = arith.truncf %55 : vector<8x256xf32> to vector<8x256xbf16>
    %c0_14 = arith.constant 0 : index
    %c0_15 = arith.constant 0 : index
    %57 = vector.load %arg5[%c0_14, %c0_15] : memref<256x128xbf16, #tpu.memory_space<vmem>>, vector<256x128xbf16>
    %cst_16 = arith.constant dense<0.000000e+00> : vector<8x128xf32>
    %58 = tpu.matmul %56, %57, %cst_16 {dimension_numbers = #tpu.dot_dimension_numbers<[1], [0], [0], [1], [0, 0, 1, 1], [], []>} : vector<8x256xbf16>, vector<256x128xbf16>, vector<8x128xf32> -> vector<8x128xf32>
    %c0_17 = arith.constant 0 : index
    %c0_18 = arith.constant 0 : index
    %59 = vector.load %arg6[%c0_17, %c0_18] : memref<1x128xf32, #tpu.memory_space<vmem>>, vector<1x128xf32>
    %60 = vector.broadcast %59 : vector<1x128xf32> to vector<8x128xf32>
    %61 = arith.addf %58, %60 : vector<8x128xf32>
    %c0_19 = arith.constant 0 : index
    %c0_20 = arith.constant 0 : index
    %62 = vector.load %arg7[%c0_19, %c0_20] : memref<8x128xf32, #tpu.memory_space<vmem>>, vector<8x128xf32>
    tpu.vector_store %arg7[%c0_19, %c0_20], %61 {strides = array<i32>} : memref<8x128xf32, #tpu.memory_space<vmem>>, vector<8x128xf32>,
    return
  }
  func.func @transform_0(%arg0: i32) -> (i32, i32) {
    %c0_i32 = arith.constant 0 : i32
    %c0_i32_0 = arith.constant 0 : i32
    return %arg0, %c0_i32 : i32, i32
  }
  func.func @transform_1(%arg0: i32) -> (i32, i32) {
    %c0_i32 = arith.constant 0 : i32
    %c0_i32_0 = arith.constant 0 : i32
    return %arg0, %c0_i32 : i32, i32
  }
  func.func @transform_2(%arg0: i32) -> (i32, i32) {
    %c0_i32 = arith.constant 0 : i32
    %c0_i32_0 = arith.constant 0 : i32
    %c0_i32_1 = arith.constant 0 : i32
    return %c0_i32, %c0_i32_0 : i32, i32
  }
  func.func @transform_3(%arg0: i32) -> (i32, i32) {
    %c0_i32 = arith.constant 0 : i32
    %c0_i32_0 = arith.constant 0 : i32
    %c0_i32_1 = arith.constant 0 : i32
    return %c0_i32, %c0_i32_0 : i32, i32
  }
  func.func @transform_4(%arg0: i32) -> (i32, i32) {
    %c0_i32 = arith.constant 0 : i32
    %c0_i32_0 = arith.constant 0 : i32
    %c0_i32_1 = arith.constant 0 : i32
    return %c0_i32, %c0_i32_0 : i32, i32
  }
  func.func @transform_5(%arg0: i32) -> (i32, i32) {
    %c0_i32 = arith.constant 0 : i32
    %c0_i32_0 = arith.constant 0 : i32
    %c0_i32_1 = arith.constant 0 : i32
    return %c0_i32, %c0_i32_0 : i32, i32
  }
  func.func @transform_6(%arg0: i32) -> (i32, i32) {
    %c0_i32 = arith.constant 0 : i32
    %c0_i32_0 = arith.constant 0 : i32
    return %arg0, %c0_i32 : i32, i32
  }
}

</mosaic_0001>

<llo_original>
// kernel: forward_dynamics_net.1
$region0: #{forward_dynamics_net.1}
  #allocation0 [shape = 'u32[]', space=smem, size = 0x4, offset = 0x4, fixed_abs, tag = 'smem constant byte address 0x4 - core index']
  #allocation1 [shape = 'u32[72,128]{1,0:T(1,128)}', space=vmem, size = 0x9000, scoped, tag = 'internal scratch']
  %s0 = inlined_call_operand.vmem [shape: bf16[16,128], index: 0, kind: input, shape index: {}]
  %s1 = inlined_call_operand.vmem [shape: s32[16,1], index: 1, kind: input, shape index: {}]
  %s2 = inlined_call_operand.hbm [shape: bf16[128,256], index: 2, kind: input, shape index: {}]
  %s3 = inlined_call_operand.vmem [shape: f32[6,256], index: 3, kind: input, shape index: {}]
  %s4 = inlined_call_operand.hbm [shape: bf16[256,128], index: 4, kind: input, shape index: {}]
  %s5 = inlined_call_operand.vmem [shape: f32[1,128], index: 5, kind: input, shape index: {}]
  %s6 = inlined_call_operand.hbm [shape: f32[16,128], index: 6, kind: output, shape index: {}]
  %s7 = sld [smem:[#allocation0]]
  $region65: #{forward_dynamics_net.1} parent=0
    _
  %s9 = ssub.s32 1, %s7
  %s10 = scalar_select 0, %s9, %s7
  $region1: #{forward_dynamics_net.1} parent=0
    #allocation2 [shape = 'u8[65536]{0}', space=vmem, size = 0x10000, scoped, tag = 'input window, operand 2, single buffered']
    #allocation3 [shape = 's32[2]{0}', space=sflag, size = 0x8, scoped, tag = 'scoped memory for forward_dynamics_net.1']
    #allocation4 [shape = 's32[2]{0}', space=sflag, size = 0x8, scoped, tag = 'scoped memory for forward_dynamics_net.1']
    #allocation5 [shape = 'u8[65536]{0}', space=vmem, size = 0x10000, scoped, tag = 'input window, operand 4, single buffered']
    #allocation6 [shape = 's32[1]{0}', space=sflag, size = 0x4, scoped, tag = 'scoped memory for forward_dynamics_net.1']
    #allocation7 [shape = 'u8[8192]{0}', space=vmem, size = 0x2000, scoped, tag = 'output window, operand 0']
    %11 = vsyncpa [#allocation3], 0
    %12 = vsyncpa [#allocation6], 0
    %13 = vsyncpa [#allocation4], 0
    %s14 = scalar_lea.sflag [#allocation4], 1
    %15 = vsyncpa %s14, 0
    loop: start=0, step=1, limit=4
    $region2: #{forward_dynamics_net.1} parent=1 // loop_pre_header
      _
    $region3: #{forward_dynamics_net.1} parent=1 // loop_header
      %s17 = sphi 0, %s21
      %p18 = scmp.ge.s32.totalorder %s17, 4
      %s27 = sphi 0, %s29
      %s30 = sphi 0, %s27
      %s31 = sphi 0, %s30
      %s47 = sphi 0, %s31
      %s53 = sphi 0, %s55
      %s56 = sphi 0, %s53
      %s57 = sphi 0, %s56
      %s73 = sphi 0, %s57
      %s77 = sphi 0, %s77
      %s79 = sphi 0, %s77
      %s80 = sphi 0, %s79
      %s94 = sphi 0, %s80
      %s98 = sphi 0, %s98
      %s100 = sphi 0, %s98
      %s101 = sphi 0, %s100
      %s115 = sphi 0, %s101
      %s119 = sphi 0, %s119
      %s121 = sphi 0, %s119
      %s122 = sphi 0, %s121
      %s136 = sphi 0, %s122
      %s140 = sphi 0, %s140
      %s142 = sphi 0, %s140
      %s143 = sphi 0, %s142
      %s157 = sphi 0, %s143
      %s163 = sphi 0, %s165
      %s166 = sphi 0, %s163
      %s167 = sphi 0, %s166
      %s183 = sphi 0, %s167
    $region4: #{forward_dynamics_net.1} parent=1 // loop_header_branch
      %20 = sbr.rel (%p18) target = $region8
    $region5: #{forward_dynamics_net.1} parent=1 // loop_body
      %s22 = ssub.s32 %s17, 1
      %s23 = ssub.s32 %s17, 2
      %s24 = sadd.s32 %s17, 1
      %s25 = ssub.s32 %s17, %s24
      %p26 = scmp.eq.s32.totalorder %s25, 0
      %s28 = sadd.s32 %s27, 1
      %s29 = scalar_select %p26, %s27, %s28
      %p32 = pneg %p26
      %p33 = scmp.eq.s32.totalorder %s17, 1
      %p34 = por %p32, %p33
      %p35 = scmp.ne.s32.totalorder %s27, %s30
      %p36 = scmp.eq.s32.totalorder %s17, 0
      %p37 = por %p35, %p36
      %p38 = scmp.ne.s32.totalorder %s27, %s30
      %p39 = scmp.eq.s32.totalorder %s22, 1
      %p40 = por %p38, %p39
      %p41 = scmp.ne.s32.totalorder %s30, %s31
      %p42 = scmp.eq.s32.totalorder %s22, 0
      %p43 = por %p41, %p42
      %p44 = scmp.ne.s32.totalorder %s30, %s31
      %p45 = scmp.eq.s32.totalorder %s23, 1
      %p46 = por %p44, %p45
      %p48 = scmp.ne.s32.totalorder %s31, %s47
      %p49 = scmp.eq.s32.totalorder %s23, 0
      %p50 = por %p48, %p49
      %s51 = ssub.s32 %s17, %s24
      %p52 = scmp.eq.s32.totalorder %s51, 0
      %s54 = sadd.s32 %s53, 1
      %s55 = scalar_select %p52, %s53, %s54
      %p58 = pneg %p52
      %p59 = scmp.eq.s32.totalorder %s17, 1
      %p60 = por %p58, %p59
      %p61 = scmp.ne.s32.totalorder %s53, %s56
      %p62 = scmp.eq.s32.totalorder %s17, 0
      %p63 = por %p61, %p62
      %p64 = scmp.ne.s32.totalorder %s53, %s56
      %p65 = scmp.eq.s32.totalorder %s22, 1
      %p66 = por %p64, %p65
      %p67 = scmp.ne.s32.totalorder %s56, %s57
      %p68 = scmp.eq.s32.totalorder %s22, 0
      %p69 = por %p67, %p68
      %p70 = scmp.ne.s32.totalorder %s56, %s57
      %p71 = scmp.eq.s32.totalorder %s23, 1
      %p72 = por %p70, %p71
      %p74 = scmp.ne.s32.totalorder %s57, %s73
      %p75 = scmp.eq.s32.totalorder %s23, 0
      %p76 = por %p74, %p75
      %s78 = sadd.s32 %s77, 1
      %p81 = scmp.eq.s32.totalorder %s17, 1
      %p82 = scmp.ne.s32.totalorder %s77, %s79
      %p83 = scmp.eq.s32.totalorder %s17, 0
      %p84 = por %p82, %p83
      %p85 = scmp.ne.s32.totalorder %s77, %s79
      %p86 = scmp.eq.s32.totalorder %s22, 1
      %p87 = por %p85, %p86
      %p88 = scmp.ne.s32.totalorder %s79, %s80
      %p89 = scmp.eq.s32.totalorder %s22, 0
      %p90 = por %p88, %p89
      %p91 = scmp.ne.s32.totalorder %s79, %s80
      %p92 = scmp.eq.s32.totalorder %s23, 1
      %p93 = por %p91, %p92
      %p95 = scmp.ne.s32.totalorder %s80, %s94
      %p96 = scmp.eq.s32.totalorder %s23, 0
      %p97 = por %p95, %p96
      %s99 = sadd.s32 %s98, 1
      %p102 = scmp.eq.s32.totalorder %s17, 1
      %p103 = scmp.ne.s32.totalorder %s98, %s100
      %p104 = scmp.eq.s32.totalorder %s17, 0
      %p105 = por %p103, %p104
      %p106 = scmp.ne.s32.totalorder %s98, %s100
      %p107 = scmp.eq.s32.totalorder %s22, 1
      %p108 = por %p106, %p107
      %p109 = scmp.ne.s32.totalorder %s100, %s101
      %p110 = scmp.eq.s32.totalorder %s22, 0
      %p111 = por %p109, %p110
      %p112 = scmp.ne.s32.totalorder %s100, %s101
      %p113 = scmp.eq.s32.totalorder %s23, 1
      %p114 = por %p112, %p113
      %p116 = scmp.ne.s32.totalorder %s101, %s115
      %p117 = scmp.eq.s32.totalorder %s23, 0
      %p118 = por %p116, %p117
      %s120 = sadd.s32 %s119, 1
      %p123 = scmp.eq.s32.totalorder %s17, 1
      %p124 = scmp.ne.s32.totalorder %s119, %s121
      %p125 = scmp.eq.s32.totalorder %s17, 0
      %p126 = por %p124, %p125
      %p127 = scmp.ne.s32.totalorder %s119, %s121
      %p128 = scmp.eq.s32.totalorder %s22, 1
      %p129 = por %p127, %p128
      %p130 = scmp.ne.s32.totalorder %s121, %s122
      %p131 = scmp.eq.s32.totalorder %s22, 0
      %p132 = por %p130, %p131
      %p133 = scmp.ne.s32.totalorder %s121, %s122
      %p134 = scmp.eq.s32.totalorder %s23, 1
      %p135 = por %p133, %p134
      %p137 = scmp.ne.s32.totalorder %s122, %s136
      %p138 = scmp.eq.s32.totalorder %s23, 0
      %p139 = por %p137, %p138
      %s141 = sadd.s32 %s140, 1
      %p144 = scmp.eq.s32.totalorder %s17, 1
      %p145 = scmp.ne.s32.totalorder %s140, %s142
      %p146 = scmp.eq.s32.totalorder %s17, 0
      %p147 = por %p145, %p146
      %p148 = scmp.ne.s32.totalorder %s140, %s142
      %p149 = scmp.eq.s32.totalorder %s22, 1
      %p150 = por %p148, %p149
      %p151 = scmp.ne.s32.totalorder %s142, %s143
      %p152 = scmp.eq.s32.totalorder %s22, 0
      %p153 = por %p151, %p152
      %p154 = scmp.ne.s32.totalorder %s142, %s143
      %p155 = scmp.eq.s32.totalorder %s23, 1
      %p156 = por %p154, %p155
      %p158 = scmp.ne.s32.totalorder %s143, %s157
      %p159 = scmp.eq.s32.totalorder %s23, 0
      %p160 = por %p158, %p159
      %s161 = ssub.s32 %s17, %s24
      %p162 = scmp.eq.s32.totalorder %s161, 0
      %s164 = sadd.s32 %s163, 1
      %s165 = scalar_select %p162, %s163, %s164
      %p168 = pneg %p162
      %p169 = scmp.eq.s32.totalorder %s17, 1
      %p170 = por %p168, %p169
      %p171 = scmp.ne.s32.totalorder %s163, %s166
      %p172 = scmp.eq.s32.totalorder %s17, 0
      %p173 = por %p171, %p172
      %p174 = scmp.ne.s32.totalorder %s163, %s166
      %p175 = scmp.eq.s32.totalorder %s22, 1
      %p176 = por %p174, %p175
      %p177 = scmp.ne.s32.totalorder %s166, %s167
      %p178 = scmp.eq.s32.totalorder %s22, 0
      %p179 = por %p177, %p178
      %p180 = scmp.ne.s32.totalorder %s166, %s167
      %p181 = scmp.eq.s32.totalorder %s23, 1
      %p182 = por %p180, %p181
      %p184 = scmp.ne.s32.totalorder %s167, %s183
      %p185 = scmp.eq.s32.totalorder %s23, 0
      %p186 = por %p184, %p185
      %p187 = scmp.le.s32.totalorder 1, %s17
      %p188 = scmp.lt.s32.totalorder %s17, 3
      %p189 = pnand %p187, %p188
      %p190 = pneg %p189
      // Predicated region
      $region9: #{forward_dynamics_net.1} parent=5 // pred_check
        _
      $region10: #{forward_dynamics_net.1} parent=5 // pred_check_branch
        %192 = sbr.rel (%p189) target = $region12
      $region11: #{forward_dynamics_net.1} parent=5 // pred_region
        %s193 = ssub.s32 %s17, 1
        // Predicated region
        $region13: #{forward_dynamics_net.1} parent=11 // pred_check
          %p194 = pneg %p90
        $region14: #{forward_dynamics_net.1} parent=11 // pred_check_branch
          %196 = sbr.rel (%p194) target = $region16
        $region15: #{forward_dynamics_net.1} parent=11 // pred_region
          %198 = vsyncadd [#allocation3], 0
          %s199 = sshll.u32 %s2, 4
          %s200 = int_to_ptr.hbm [resolvable:$true] %s199
          %s201 = sshll.u32 [#allocation2], 4
          %s202 = int_to_ptr.vmem [resolvable:$true] %s201
          %207 = dma.hbm_to_vmem [thread:$0]  %s200, 2048, %s202, [#allocation3], 128, 128, 8
        $region16: #{forward_dynamics_net.1} parent=11 // pred_fallthru
          _
        // Predicated region
        $region17: #{forward_dynamics_net.1} parent=11 // pred_check
          %p208 = pneg %p111
        $region18: #{forward_dynamics_net.1} parent=11 // pred_check_branch
          %210 = sbr.rel (%p208) target = $region20
        $region19: #{forward_dynamics_net.1} parent=11 // pred_region
          _
        $region20: #{forward_dynamics_net.1} parent=11 // pred_fallthru
          _
        // Predicated region
        $region21: #{forward_dynamics_net.1} parent=11 // pred_check
          %p211 = pneg %p132
        $region22: #{forward_dynamics_net.1} parent=11 // pred_check_branch
          %213 = sbr.rel (%p211) target = $region24
        $region23: #{forward_dynamics_net.1} parent=11 // pred_region
          %215 = vsyncadd [#allocation6], 0
          %s216 = sshll.u32 %s4, 4
          %s217 = int_to_ptr.hbm [resolvable:$true] %s216
          %s218 = sshll.u32 [#allocation5], 4
          %s219 = int_to_ptr.vmem [resolvable:$true] %s218
          %224 = dma.hbm_to_vmem [thread:$0]  %s217, 2048, %s219, [#allocation6], 64, 64, 4
        $region24: #{forward_dynamics_net.1} parent=11 // pred_fallthru
          _
        // Predicated region
        $region25: #{forward_dynamics_net.1} parent=11 // pred_check
          %p225 = pneg %p153
        $region26: #{forward_dynamics_net.1} parent=11 // pred_check_branch
          %227 = sbr.rel (%p225) target = $region28
        $region27: #{forward_dynamics_net.1} parent=11 // pred_region
          _
        $region28: #{forward_dynamics_net.1} parent=11 // pred_fallthru
          _
      $region12: #{forward_dynamics_net.1} parent=5 // pred_fallthru
        _
      %p228 = scmp.lt.s32.totalorder %s17, 2
      // Predicated region
      $region29: #{forward_dynamics_net.1} parent=5 // pred_check
        %p229 = pneg %p228
      $region30: #{forward_dynamics_net.1} parent=5 // pred_check_branch
        %231 = sbr.rel (%p229) target = $region32
      $region31: #{forward_dynamics_net.1} parent=5 // pred_region
        // Predicated region
        $region33: #{forward_dynamics_net.1} parent=31 // pred_check
          %p232 = pneg %p37
        $region34: #{forward_dynamics_net.1} parent=31 // pred_check_branch
          %234 = sbr.rel (%p232) target = $region36
        $region35: #{forward_dynamics_net.1} parent=31 // pred_region
          %p235 = scmp.lt.s32.totalorder %s17, 1
          %s236 = scalar_select %p235, %s17, 1
          %s237 = smul.addr %s236, 4
          %s238 = scalar_lea.vmem %s0, %s237
        $region36: #{forward_dynamics_net.1} parent=31 // pred_fallthru
          _
        // Predicated region
        $region37: #{forward_dynamics_net.1} parent=31 // pred_check
          %p239 = pneg %p63
        $region38: #{forward_dynamics_net.1} parent=31 // pred_check_branch
          %241 = sbr.rel (%p239) target = $region40
        $region39: #{forward_dynamics_net.1} parent=31 // pred_region
          %p242 = scmp.lt.s32.totalorder %s17, 1
          %s243 = scalar_select %p242, %s17, 1
          %s244 = smul.addr %s243, 8
          %s245 = scalar_lea.vmem %s1, %s244
        $region40: #{forward_dynamics_net.1} parent=31 // pred_fallthru
          _
      $region32: #{forward_dynamics_net.1} parent=5 // pred_fallthru
        _
      %p246 = scmp.le.s32.totalorder 1, %s17
      %p247 = scmp.lt.s32.totalorder %s17, 3
      %p248 = pnand %p246, %p247
      %p249 = pneg %p248
      // Predicated region
      $region41: #{forward_dynamics_net.1} parent=5 // pred_check
        _
      $region42: #{forward_dynamics_net.1} parent=5 // pred_check_branch
        %251 = sbr.rel (%p248) target = $region44
      $region43: #{forward_dynamics_net.1} parent=5 // pred_region
        %s252 = ssub.s32 %s17, 1
        // Predicated region
        $region45: #{forward_dynamics_net.1} parent=43 // pred_check
          %p253 = pneg %p90
        $region46: #{forward_dynamics_net.1} parent=43 // pred_check_branch
          %255 = sbr.rel (%p253) target = $region48
        $region47: #{forward_dynamics_net.1} parent=43 // pred_region
          %257 = dma.done [#allocation3], 2048
        $region48: #{forward_dynamics_net.1} parent=43 // pred_fallthru
          _
        // Predicated region
        $region49: #{forward_dynamics_net.1} parent=43 // pred_check
          %p258 = pneg %p132
        $region50: #{forward_dynamics_net.1} parent=43 // pred_check_branch
          %260 = sbr.rel (%p258) target = $region52
        $region51: #{forward_dynamics_net.1} parent=43 // pred_region
          %262 = dma.done [#allocation6], 2048
        $region52: #{forward_dynamics_net.1} parent=43 // pred_fallthru
          _
        %p263 = scmp.lt.s32.totalorder %s22, 1
        %s264 = scalar_select %p263, %s22, 1
        %s265 = smul.addr %s264, 4
        %s266 = scalar_lea.vmem %s0, %s265
        %p267 = pneg %p43
        %p268 = pneg %p40
        %p269 = scmp.lt.s32.totalorder %s22, 1
        %s270 = scalar_select %p269, %s22, 1
        %s271 = smul.addr %s270, 8
        %s272 = scalar_lea.vmem %s1, %s271
        %p273 = pneg %p69
        %p274 = pneg %p66
        %p275 = pneg %p90
        %p276 = pneg %p87
        %p277 = pneg %p111
        %p278 = pneg %p108
        %p279 = pneg %p132
        %p280 = pneg %p129
        %p281 = pneg %p153
        %p282 = pneg %p150
        %p283 = pneg %p179
        %p284 = pneg %p176
        %s285 = sand.u32 %s166, 1
        %s286 = scalar_lea.sflag [#allocation4], %s285
        %s287 = sand.u32 %s166, 1
        %s288 = smul.addr %s287, 8
        %s289 = scalar_lea.vmem [#allocation7], %s288
        %p290 = scmp.lt.s32.totalorder %s22, 1
        %s291 = scalar_select %p290, %s22, 1
        %s292 = smul.addr %s291, 4
        %s293 = scalar_lea.vmem %s0, %s292
        %p294 = scmp.lt.s32.totalorder %s22, 1
        %s295 = scalar_select %p294, %s22, 1
        %s296 = smul.addr %s295, 8
        %s297 = scalar_lea.vmem %s1, %s296
        %v298 = vld [vmem:[%s293] sm:$0xf]
        %v299 = vld [vmem:[%s297] sm:$0xff]
        %v300 = vld [vmem:[#allocation2] sm:$0xff]
        %v301 = vld [vmem:[#allocation2 + $0x8] sm:$0xff]
        %v302 = vld [vmem:[#allocation2 + $0x10] sm:$0xff]
        %v303 = vld [vmem:[#allocation2 + $0x18] sm:$0xff]
        %v304 = vld [vmem:[#allocation2 + $0x20] sm:$0xff]
        %v305 = vld [vmem:[#allocation2 + $0x28] sm:$0xff]
        %v306 = vld [vmem:[#allocation2 + $0x30] sm:$0xff]
        %v307 = vld [vmem:[#allocation2 + $0x38] sm:$0xff]
        %v308 = vld [vmem:[#allocation2 + $0x40] sm:$0xff]
        %v309 = vld [vmem:[#allocation2 + $0x48] sm:$0xff]
        %v310 = vld [vmem:[#allocation2 + $0x50] sm:$0xff]
        %v311 = vld [vmem:[#allocation2 + $0x58] sm:$0xff]
        %v312 = vld [vmem:[#allocation2 + $0x60] sm:$0xff]
        %v313 = vld [vmem:[#allocation2 + $0x68] sm:$0xff]
        %v314 = vld [vmem:[#allocation2 + $0x70] sm:$0xff]
        %v315 = vld [vmem:[#allocation2 + $0x78] sm:$0xff]
        %vm316 = vcmp.eq.s32.totalorder %v299, 0
        %v317 = vld [vmem:[%s3] ss:$8 sm:$0x3]
        %v318 = vsel %vm316, 1, 0
        %319 = vset.pattern.permute.xlu0 0
        %320 = vperm.xlu0 %319, %v318
        %v321 = vpop.permute.xlu0 %320
        %vm322 = vcmp.eq.s32.totalorder %v321, 1
        %v324 = vperm.slane %v317, 0
        %v325 = vperm.slane %v317, 1
        %v328 = vsel %vm322, %v324, 0.0
        %v329 = vsel %vm322, %v325, 0.0
        %vm330 = vcmp.eq.s32.totalorder %v299, 1
        %s331 = scalar_lea.vmem %s3, 1
        %v332 = vld [vmem:[%s331] ss:$8 sm:$0x3]
        %v333 = vsel %vm330, 1, 0
        %334 = vset.pattern.permute.xlu0 0
        %335 = vperm.xlu0 %334, %v333
        %v336 = vpop.permute.xlu0 %335
        %vm337 = vcmp.eq.s32.totalorder %v336, 1
        %v339 = vperm.slane %v332, 0
        %v340 = vperm.slane %v332, 1
        %v343 = vsel %vm337, %v339, %v328
        %v344 = vsel %vm337, %v340, %v329
        %vm345 = vcmp.eq.s32.totalorder %v299, 2
        %s346 = scalar_lea.vmem %s3, 2
        %v347 = vld [vmem:[%s346] ss:$8 sm:$0x3]
        %v348 = vsel %vm345, 1, 0
        %349 = vset.pattern.permute.xlu0 0
        %350 = vperm.xlu0 %349, %v348
        %v351 = vpop.permute.xlu0 %350
        %vm352 = vcmp.eq.s32.totalorder %v351, 1
        %v354 = vperm.slane %v347, 0
        %v355 = vperm.slane %v347, 1
        %v358 = vsel %vm352, %v354, %v343
        %v359 = vsel %vm352, %v355, %v344
        %vm360 = vcmp.eq.s32.totalorder %v299, 3
        %s361 = scalar_lea.vmem %s3, 3
        %v362 = vld [vmem:[%s361] ss:$8 sm:$0x3]
        %v363 = vsel %vm360, 1, 0
        %364 = vset.pattern.permute.xlu0 0
        %365 = vperm.xlu0 %364, %v363
        %v366 = vpop.permute.xlu0 %365
        %vm367 = vcmp.eq.s32.totalorder %v366, 1
        %v369 = vperm.slane %v362, 0
        %v370 = vperm.slane %v362, 1
        %v373 = vsel %vm367, %v369, %v358
        %v374 = vsel %vm367, %v370, %v359
        %vm375 = vcmp.eq.s32.totalorder %v299, 4
        %s376 = scalar_lea.vmem %s3, 4
        %v377 = vld [vmem:[%s376] ss:$8 sm:$0x3]
        %v378 = vsel %vm375, 1, 0
        %379 = vset.pattern.permute.xlu0 0
        %380 = vperm.xlu0 %379, %v378
        %v381 = vpop.permute.xlu0 %380
        %vm382 = vcmp.eq.s32.totalorder %v381, 1
        %v384 = vperm.slane %v377, 0
        %v385 = vperm.slane %v377, 1
        %v388 = vsel %vm382, %v384, %v373
        %v389 = vsel %vm382, %v385, %v374
        %vm390 = vcmp.eq.s32.totalorder %v299, 5
        %s391 = scalar_lea.vmem %s3, 5
        %v392 = vld [vmem:[%s391] ss:$8 sm:$0x3]
        %v393 = vsel %vm390, 1, 0
        %394 = vset.pattern.permute.xlu0 0
        %395 = vperm.xlu0 %394, %v393
        %v396 = vpop.permute.xlu0 %395
        %vm397 = vcmp.eq.s32.totalorder %v396, 1
        %v399 = vperm.slane %v392, 0
        %v400 = vperm.slane %v392, 1
        %v403 = vsel %vm397, %v399, %v388
        %v404 = vsel %vm397, %v400, %v389
        %v421 = vunpack.c.l.b16 %v300
        %v422 = vunpack.c.h.b16 %v300
        %v423 = vunpack.c.l.b16 %v301
        %v424 = vunpack.c.h.b16 %v301
        %v425 = vunpack.c.l.b16 %v302
        %v426 = vunpack.c.h.b16 %v302
        %v427 = vunpack.c.l.b16 %v303
        %v428 = vunpack.c.h.b16 %v303
        %v429 = vunpack.c.l.b16 %v304
        %v430 = vunpack.c.h.b16 %v304
        %v431 = vunpack.c.l.b16 %v305
        %v432 = vunpack.c.h.b16 %v305
        %v433 = vunpack.c.l.b16 %v306
        %v434 = vunpack.c.h.b16 %v306
        %v435 = vunpack.c.l.b16 %v307
        %v436 = vunpack.c.h.b16 %v307
        %v437 = vunpack.c.l.b16 %v308
        %v438 = vunpack.c.h.b16 %v308
        %v439 = vunpack.c.l.b16 %v309
        %v440 = vunpack.c.h.b16 %v309
        %v441 = vunpack.c.l.b16 %v310
        %v442 = vunpack.c.h.b16 %v310
        %v443 = vunpack.c.l.b16 %v311
        %v444 = vunpack.c.h.b16 %v311
        %v445 = vunpack.c.l.b16 %v312
        %v446 = vunpack.c.h.b16 %v312
        %v447 = vunpack.c.l.b16 %v313
        %v448 = vunpack.c.h.b16 %v313
        %v449 = vunpack.c.l.b16 %v314
        %v450 = vunpack.c.h.b16 %v314
        %v451 = vunpack.c.l.b16 %v315
        %v452 = vunpack.c.h.b16 %v315
        %v453 = vpack.c.b16 %v423, %v421
        %v454 = vpack.c.b16 %v424, %v422
        %v455 = vpack.c.b16 %v427, %v425
        %v456 = vpack.c.b16 %v428, %v426
        %v457 = vpack.c.b16 %v431, %v429
        %v458 = vpack.c.b16 %v432, %v430
        %v459 = vpack.c.b16 %v435, %v433
        %v460 = vpack.c.b16 %v436, %v434
        %v461 = vpack.c.b16 %v439, %v437
        %v462 = vpack.c.b16 %v440, %v438
        %v463 = vpack.c.b16 %v443, %v441
        %v464 = vpack.c.b16 %v444, %v442
        %v465 = vpack.c.b16 %v447, %v445
        %v466 = vpack.c.b16 %v448, %v446
        %v467 = vpack.c.b16 %v451, %v449
        %v468 = vpack.c.b16 %v452, %v450
        %485 = vmatpush.bf16.msra.mxu0 %v467
        %486 = vmatpush.bf16.msra.mxu0 %v465
        %487 = vmatpush.bf16.msra.mxu0 %v463
        %488 = vmatpush.bf16.msra.mxu0 %v461
        %489 = vmatpush.bf16.msra.mxu0 %v459
        %490 = vmatpush.bf16.msra.mxu0 %v457
        %491 = vmatpush.bf16.msra.mxu0 %v455
        %492 = vmatpush.bf16.msra.mxu0 %v453
        %493 = vmatmul.bf16.gmra.mxu0 %v298
        %v494 = vpop.f32.mrf.mxu0
        %v495 = vadd.f32 %v403, %v494
        %v496 = vpop.f32.mrf.mxu0
        %497 = vdwg.mxu0
        %498 = vmatpush.bf16.msra.mxu0 %v468
        %499 = vmatpush.bf16.msra.mxu0 %v466
        %500 = vmatpush.bf16.msra.mxu0 %v464
        %501 = vmatpush.bf16.msra.mxu0 %v462
        %502 = vmatpush.bf16.msra.mxu0 %v460
        %503 = vmatpush.bf16.msra.mxu0 %v458
        %504 = vmatpush.bf16.msra.mxu0 %v456
        %505 = vmatpush.bf16.msra.mxu0 %v454
        %506 = vmatmul.bf16.gmra.mxu0 %v298
        %v507 = vpop.f32.mrf.mxu0
        %v508 = vadd.f32 %v404, %v507
        %v509 = vpop.f32.mrf.mxu0
        %510 = vdwg.mxu0
        %v511 = vmax.f32 %v495, 0.0
        %v512 = vmax.f32 %v508, 0.0
        %v513 = vpack.c.bf16 %v511, %v511
        %v514 = vpack.c.bf16 %v512, %v512
        %v515 = vld [vmem:[#allocation5] sm:$0xf]
        %v516 = vld [vmem:[#allocation5 + $0x4] sm:$0xf]
        %v517 = vld [vmem:[#allocation5 + $0x8] sm:$0xf]
        %v518 = vld [vmem:[#allocation5 + $0xc] sm:$0xf]
        %v519 = vld [vmem:[#allocation5 + $0x10] sm:$0xf]
        %v520 = vld [vmem:[#allocation5 + $0x14] sm:$0xf]
        %v521 = vld [vmem:[#allocation5 + $0x18] sm:$0xf]
        %v522 = vld [vmem:[#allocation5 + $0x1c] sm:$0xf]
        %v523 = vld [vmem:[#allocation5 + $0x20] sm:$0xf]
        %v524 = vld [vmem:[#allocation5 + $0x24] sm:$0xf]
        %v525 = vld [vmem:[#allocation5 + $0x28] sm:$0xf]
        %v526 = vld [vmem:[#allocation5 + $0x2c] sm:$0xf]
        %v527 = vld [vmem:[#allocation5 + $0x30] sm:$0xf]
        %v528 = vld [vmem:[#allocation5 + $0x34] sm:$0xf]
        %v529 = vld [vmem:[#allocation5 + $0x38] sm:$0xf]
        %v530 = vld [vmem:[#allocation5 + $0x3c] sm:$0xf]
        %v531 = vld [vmem:[#allocation5 + $0x40] sm:$0xf]
        %v532 = vld [vmem:[#allocation5 + $0x44] sm:$0xf]
        %v533 = vld [vmem:[#allocation5 + $0x48] sm:$0xf]
        %v534 = vld [vmem:[#allocation5 + $0x4c] sm:$0xf]
        %v535 = vld [vmem:[#allocation5 + $0x50] sm:$0xf]
        %v536 = vld [vmem:[#allocation5 + $0x54] sm:$0xf]
        %v537 = vld [vmem:[#allocation5 + $0x58] sm:$0xf]
        %v538 = vld [vmem:[#allocation5 + $0x5c] sm:$0xf]
        %v539 = vld [vmem:[#allocation5 + $0x60] sm:$0xf]
        %v540 = vld [vmem:[#allocation5 + $0x64] sm:$0xf]
        %v541 = vld [vmem:[#allocation5 + $0x68] sm:$0xf]
        %v542 = vld [vmem:[#allocation5 + $0x6c] sm:$0xf]
        %v543 = vld [vmem:[#allocation5 + $0x70] sm:$0xf]
        %v544 = vld [vmem:[#allocation5 + $0x74] sm:$0xf]
        %v545 = vld [vmem:[#allocation5 + $0x78] sm:$0xf]
        %v546 = vld [vmem:[#allocation5 + $0x7c] sm:$0xf]
        %v547 = vld [vmem:[%s5] sm:$0x1]
        %v549 = vperm.slane %v547, 0
        %v583 = vunpack.c.l.b16 %v515
        %v584 = vunpack.c.l.b16 %v516
        %v585 = vunpack.c.l.b16 %v517
        %v586 = vunpack.c.l.b16 %v518
        %v587 = vunpack.c.l.b16 %v519
        %v588 = vunpack.c.l.b16 %v520
        %v589 = vunpack.c.l.b16 %v521
        %v590 = vunpack.c.l.b16 %v522
        %v591 = vunpack.c.l.b16 %v523
        %v592 = vunpack.c.l.b16 %v524
        %v593 = vunpack.c.l.b16 %v525
        %v594 = vunpack.c.l.b16 %v526
        %v595 = vunpack.c.l.b16 %v527
        %v596 = vunpack.c.l.b16 %v528
        %v597 = vunpack.c.l.b16 %v529
        %v598 = vunpack.c.l.b16 %v530
        %v599 = vunpack.c.l.b16 %v531
        %v600 = vunpack.c.l.b16 %v532
        %v601 = vunpack.c.l.b16 %v533
        %v602 = vunpack.c.l.b16 %v534
        %v603 = vunpack.c.l.b16 %v535
        %v604 = vunpack.c.l.b16 %v536
        %v605 = vunpack.c.l.b16 %v537
        %v606 = vunpack.c.l.b16 %v538
        %v607 = vunpack.c.l.b16 %v539
        %v608 = vunpack.c.l.b16 %v540
        %v609 = vunpack.c.l.b16 %v541
        %v610 = vunpack.c.l.b16 %v542
        %v611 = vunpack.c.l.b16 %v543
        %v612 = vunpack.c.l.b16 %v544
        %v613 = vunpack.c.l.b16 %v545
        %v614 = vunpack.c.l.b16 %v546
        %v615 = vpack.c.b16 %v584, %v583
        %v616 = vpack.c.b16 %v586, %v585
        %v617 = vpack.c.b16 %v588, %v587
        %v618 = vpack.c.b16 %v590, %v589
        %v619 = vpack.c.b16 %v592, %v591
        %v620 = vpack.c.b16 %v594, %v593
        %v621 = vpack.c.b16 %v596, %v595
        %v622 = vpack.c.b16 %v598, %v597
        %v623 = vpack.c.b16 %v600, %v599
        %v624 = vpack.c.b16 %v602, %v601
        %v625 = vpack.c.b16 %v604, %v603
        %v626 = vpack.c.b16 %v606, %v605
        %v627 = vpack.c.b16 %v608, %v607
        %v628 = vpack.c.b16 %v610, %v609
        %v629 = vpack.c.b16 %v612, %v611
        %v630 = vpack.c.b16 %v614, %v613
        %647 = vmatpush.bf16.msra.mxu0 %v622
        %648 = vmatpush.bf16.msra.mxu0 %v621
        %649 = vmatpush.bf16.msra.mxu0 %v620
        %650 = vmatpush.bf16.msra.mxu0 %v619
        %651 = vmatpush.bf16.msra.mxu0 %v618
        %652 = vmatpush.bf16.msra.mxu0 %v617
        %653 = vmatpush.bf16.msra.mxu0 %v616
        %654 = vmatpush.bf16.msra.mxu0 %v615
        %655 = vmatmul.bf16.gmra.mxu0 %v513
        %v656 = vpop.f32.mrf.mxu0
        %v657 = vadd.f32 %v549, %v656
        %v658 = vpop.f32.mrf.mxu0
        %659 = vdwg.mxu0
        %660 = vmatpush.bf16.msra.mxu0 %v630
        %661 = vmatpush.bf16.msra.mxu0 %v629
        %662 = vmatpush.bf16.msra.mxu0 %v628
        %663 = vmatpush.bf16.msra.mxu0 %v627
        %664 = vmatpush.bf16.msra.mxu0 %v626
        %665 = vmatpush.bf16.msra.mxu0 %v625
        %666 = vmatpush.bf16.msra.mxu0 %v624
        %667 = vmatpush.bf16.msra.mxu0 %v623
        %668 = vmatmul.bf16.gmra.mxu0 %v514
        %v669 = vpop.f32.mrf.mxu0
        %v670 = vadd.f32 %v657, %v669
        %v671 = vpop.f32.mrf.mxu0
        %672 = vdwg.mxu0
        %673 = vst [vmem:[%s289] sm:$0xff] %v670
        %s674 = sand.u32 %s166, 1
        %s675 = scalar_lea.sflag [#allocation4], %s674
        %s676 = sand.u32 %s166, 1
        %s677 = smul.addr %s676, 8
        %s678 = scalar_lea.vmem [#allocation7], %s677
        // Predicated region
        $region53: #{forward_dynamics_net.1} parent=43 // pred_check
          %p679 = pneg %p176
        $region54: #{forward_dynamics_net.1} parent=43 // pred_check_branch
          %681 = sbr.rel (%p679) target = $region56
        $region55: #{forward_dynamics_net.1} parent=43 // pred_region
          %683 = vsyncadd %s675, 0
          %s684 = smul.addr %s22, 8
          %s685 = scalar_lea.hbm %s6, %s684
          %s687 = sshll.u32 %s678, 4
          %s688 = int_to_ptr.vmem [resolvable:$true] %s687
          %s689 = sshll.u32 %s685, 4
          %s690 = int_to_ptr.hbm [resolvable:$true] %s689
          %692 = dma.vmem_to_hbm [thread:$0]  %s688, 128, %s690, %s675
        $region56: #{forward_dynamics_net.1} parent=43 // pred_fallthru
          _
      $region44: #{forward_dynamics_net.1} parent=5 // pred_fallthru
        _
      %p693 = scmp.le.s32.totalorder 2, %s17
      // Predicated region
      $region57: #{forward_dynamics_net.1} parent=5 // pred_check
        %p694 = pneg %p693
      $region58: #{forward_dynamics_net.1} parent=5 // pred_check_branch
        %696 = sbr.rel (%p694) target = $region60
      $region59: #{forward_dynamics_net.1} parent=5 // pred_region
        %s697 = ssub.s32 %s17, 2
        // Predicated region
        $region61: #{forward_dynamics_net.1} parent=59 // pred_check
          %p698 = pneg %p182
        $region62: #{forward_dynamics_net.1} parent=59 // pred_check_branch
          %700 = sbr.rel (%p698) target = $region64
        $region63: #{forward_dynamics_net.1} parent=59 // pred_region
          %s701 = sand.u32 %s167, 1
          %s702 = scalar_lea.sflag [#allocation4], %s701
          %s703 = sand.u32 %s167, 1
          %s704 = smul.addr %s703, 8
          %s705 = scalar_lea.vmem [#allocation7], %s704
          %707 = dma.done %s702, 128
        $region64: #{forward_dynamics_net.1} parent=59 // pred_fallthru
          _
      $region60: #{forward_dynamics_net.1} parent=5 // pred_fallthru
        _
    $region6: #{forward_dynamics_net.1} parent=1 // loop_footer
      %s21 = sadd.s32 1, %s17
    $region7: #{forward_dynamics_net.1} parent=1 // loop_footer_branch
      %16 = sbr.rel target = $region3
    $region8: #{forward_dynamics_net.1} parent=1 // loop_exit
      _
    %708 = vsyncpa [#allocation3], 1
    %s709 = scalar_lea.sflag [#allocation3], 1
    %710 = vsyncpa %s709, 1
    %711 = vsyncpa [#allocation6], 1
    %712 = vsyncpa [#allocation4], 1
    %s713 = scalar_lea.sflag [#allocation4], 1
    %714 = vsyncpa %s713, 1

</llo_original>
